<compile_context>
chip_gen: v7x
topology: tpu7x:2x2x1
jax: 0.10.0
libtpu: 0.0.40
codegen_flags: <defaults>
</compile_context>

<pallas_src>
import jax
import jax.numpy as jnp
from jax.experimental import pallas as pl
from jax.experimental.pallas import tpu as pltpu


def _embed_kernel(ids_ref, w_ref, out_ref, acc_ref):
    # ids_ref: (TB, 1) int32   w_ref: (VB, d)   out_ref: (TB, d)   acc_ref: (TB, d) f32
    k = pl.program_id(1)
    num_vocab_blocks = pl.num_programs(1)
    tb = ids_ref.shape[0]
    vb = w_ref.shape[0]

    @pl.when(k == 0)
    def _init():
        acc_ref[...] = jnp.zeros_like(acc_ref)

    ids = ids_ref[...]                                           # (TB, 1)
    base = k * vb                                                # global vocab offset of this tile
    iota = jax.lax.broadcasted_iota(jnp.int32, (tb, vb), 1) + base
    onehot = (ids == iota).astype(w_ref.dtype)                   # exact 0/1, (TB, VB)
    # Partial gather for this vocab tile; non-matching tiles contribute exact zeros.
    acc_ref[...] += jnp.dot(onehot, w_ref[...], preferred_element_type=jnp.float32)

    @pl.when(k == num_vocab_blocks - 1)
    def _finalize():
        out_ref[...] = acc_ref[...].astype(out_ref.dtype)


def _round_up(a, b):
    return (a + b - 1) // b * b


def embedding_forward(x_ids, weight, *, token_block=256, vocab_block=1024):
    """Pallas equivalent of Embedding.forward: [m, S] int -> [m, S, d]."""
    m, s = x_ids.shape
    vocab, d = weight.shape
    n = m * s

    # Token tiling: MXU-native M where possible (256 on v6e/v7x; still fine on v5e),
    # collapsed to a single grid step for small problems.  Multiple of 8 (f32 sublane).
    tb = min(token_block, _round_up(n, 8))
    n_pad = _round_up(n, tb)

    # Vocab tiling (reduction axis, innermost): bounds per-step VMEM to 2*vb*d*4 bytes.
    vb = min(vocab_block, _round_up(vocab, 8))
    v_pad = _round_up(vocab, vb)

    # Clip ids (matches jnp.take clipping; keeps padded/OOB ids harmless) and pad the
    # token count — padded rows are computed but sliced off below.
    ids_flat = jnp.clip(x_ids.reshape(n).astype(jnp.int32), 0, vocab - 1)
    ids_flat = jnp.pad(ids_flat, (0, n_pad - n)).reshape(n_pad, 1)
    w = weight if v_pad == vocab else jnp.pad(weight, ((0, v_pad - vocab), (0, 0)))

    grid = (n_pad // tb, v_pad // vb)

    # VMEM budget: double-buffered ids/weight/output tiles + accumulator + one-hot.
    tile_bytes = (
        2 * tb * 4          # ids tiles
        + 2 * vb * d * 4    # weight tiles
        + 2 * tb * d * 4    # output tiles
        + tb * d * 4        # f32 accumulator scratch
        + tb * vb * 4       # one-hot working set
    )
    vmem_limit = int(min(max(2 * tile_bytes, 16 * 1024 * 1024), 48 * 1024 * 1024))

    cost = pl.CostEstimate(
        flops=2 * n_pad * v_pad * d,
        transcendentals=0,
        bytes_accessed=n_pad * 4 + grid[0] * v_pad * d * 4 + n_pad * d * 4,
    )

    out_flat = pl.pallas_call(
        _embed_kernel,
        out_shape=jax.ShapeDtypeStruct((n_pad, d), weight.dtype),
        grid=grid,
        in_specs=[
            pl.BlockSpec((tb, 1), lambda i, k: (i, 0)),   # token-id tile
            pl.BlockSpec((vb, d), lambda i, k: (k, 0)),   # vocab tile of the table
        ],
        out_specs=pl.BlockSpec((tb, d), lambda i, k: (i, 0)),
        scratch_shapes=[pltpu.VMEM((tb, d), jnp.float32)],
        compiler_params=pltpu.CompilerParams(
            dimension_semantics=("parallel", "arbitrary"),
            vmem_limit_bytes=vmem_limit,
        ),
        cost_estimate=cost,
    )(ids_flat, w)

    return out_flat[:n].reshape(m, s, d)


if __name__ == "__main__":
    key = jax.random.PRNGKey(0)
    k_w, k_x = jax.random.split(key)

    # Small shapes consistent with Embedding(V, E_dim): V.max_size=64, E_dim=32,
    # batch m=2, max_num_1d_tokens=16.
    V_max_size = 64
    E_dim = 32
    m, S = 2, 16

    weight = jax.random.normal(k_w, (V_max_size, E_dim), dtype=jnp.float32)
    x_ids = jax.random.randint(k_x, (m, S), 0, V_max_size, dtype=jnp.int32)

    out = embedding_forward(x_ids, weight)
    out = jax.block_until_ready(out)

    # Reference check against plain gather (same semantics as torch.nn.Embedding).
    ref = jnp.take(weight, x_ids, axis=0)
    assert out.shape == (m, S, E_dim)
    assert jnp.allclose(out, ref, atol=0.0, rtol=0.0), "mismatch vs gather reference"

    print("KERNEL_OK")
</pallas_src>

<mosaic_0001>
module attributes {stable_mosaic.version = 11 : i64} {
  func.func @_embed_kernel(%arg0: i32, %arg1: i32, %arg2: memref<32x1xi32, #tpu.memory_space<vmem>>, %arg3: memref<64x32xf32, #tpu.memory_space<vmem>>, %arg4: memref<32x32xf32, #tpu.memory_space<vmem>>, %arg5: memref<32x32xf32, #tpu.memory_space<vmem>>) attributes {dimension_semantics = [#tpu.dimension_semantics<parallel>, #tpu.dimension_semantics<arbitrary>], iteration_bounds = array<i64: 1, 1>, scalar_prefetch = 0 : i64, scratch_operands = 1 : i64, tpu.core_type = #tpu.core_type<tc>, window_params = [{transform_indices = @transform_0, window_bounds = array<i64: 32, 1>}, {transform_indices = @transform_1, window_bounds = array<i64: 64, 32>}, {transform_indices = @transform_2, window_bounds = array<i64: 32, 32>}]} {
    %c0_i32 = arith.constant 0 : i32
    %0 = arith.cmpi eq, %arg1, %c0_i32 : i32
    %1 = arith.extui %0 : i1 to i32
    %c0_i32_0 = arith.constant 0 : i32
    %2 = arith.cmpi ne, %1, %c0_i32_0 : i32
    scf.if %2 {
      %cst_10 = arith.constant 0.000000e+00 : f32
      %20 = vector.broadcast %cst_10 : f32 to vector<32x32xf32>
      %c0_11 = arith.constant 0 : index
      %c0_12 = arith.constant 0 : index
      %21 = vector.load %arg5[%c0_11, %c0_12] : memref<32x32xf32, #tpu.memory_space<vmem>>, vector<32x32xf32>
      tpu.vector_store %arg5[%c0_11, %c0_12], %20 {strides = array<i32>} : memref<32x32xf32, #tpu.memory_space<vmem>>, vector<32x32xf32>,
    } else {
    }
    %c0 = arith.constant 0 : index
    %c0_1 = arith.constant 0 : index
    %3 = vector.load %arg2[%c0, %c0_1] : memref<32x1xi32, #tpu.memory_space<vmem>>, vector<32x1xi32>
    %c64_i32 = arith.constant 64 : i32
    %4 = arith.muli %arg1, %c64_i32 : i32
    %5 = tpu.iota {dimensions = array<i32: 1>} : vector<32x64xi32>
    %6 = vector.broadcast %4 : i32 to vector<32x64xi32>
    %7 = arith.addi %5, %6 : vector<32x64xi32>
    %8 = vector.broadcast %3 : vector<32x1xi32> to vector<32x64xi32>
    %9 = arith.cmpi eq, %8, %7 : vector<32x64xi32>
    %10 = arith.extui %9 : vector<32x64xi1> to vector<32x64xi32>
    %11 = arith.sitofp %10 : vector<32x64xi32> to vector<32x64xf32>
    %c0_2 = arith.constant 0 : index
    %c0_3 = arith.constant 0 : index
    %12 = vector.load %arg5[%c0_2, %c0_3] : memref<32x32xf32, #tpu.memory_space<vmem>>, vector<32x32xf32>
    %c0_4 = arith.constant 0 : index
    %c0_5 = arith.constant 0 : index
    %13 = vector.load %arg3[%c0_4, %c0_5] : memref<64x32xf32, #tpu.memory_space<vmem>>, vector<64x32xf32>
    %cst = arith.constant dense<0.000000e+00> : vector<32x32xf32>
    %14 = tpu.matmul %11, %13, %cst {dimension_numbers = #tpu.dot_dimension_numbers<[1], [0], [0], [1], [0, 0, 1, 1], [], []>} : vector<32x64xf32>, vector<64x32xf32>, vector<32x32xf32> -> vector<32x32xf32>
    %15 = arith.addf %12, %14 : vector<32x32xf32>
    %c0_6 = arith.constant 0 : index
    %c0_7 = arith.constant 0 : index
    %16 = vector.load %arg5[%c0_6, %c0_7] : memref<32x32xf32, #tpu.memory_space<vmem>>, vector<32x32xf32>
    tpu.vector_store %arg5[%c0_6, %c0_7], %15 {strides = array<i32>} : memref<32x32xf32, #tpu.memory_space<vmem>>, vector<32x32xf32>,
    %c0_i32_8 = arith.constant 0 : i32
    %17 = arith.cmpi eq, %arg1, %c0_i32_8 : i32
    %18 = arith.extui %17 : i1 to i32
    %c0_i32_9 = arith.constant 0 : i32
    %19 = arith.cmpi ne, %18, %c0_i32_9 : i32
    scf.if %19 {
      %c0_10 = arith.constant 0 : index
      %c0_11 = arith.constant 0 : index
      %20 = vector.load %arg5[%c0_10, %c0_11] : memref<32x32xf32, #tpu.memory_space<vmem>>, vector<32x32xf32>
      %c0_12 = arith.constant 0 : index
      %c0_13 = arith.constant 0 : index
      %21 = vector.load %arg4[%c0_12, %c0_13] : memref<32x32xf32, #tpu.memory_space<vmem>>, vector<32x32xf32>
      tpu.vector_store %arg4[%c0_12, %c0_13], %20 {strides = array<i32>} : memref<32x32xf32, #tpu.memory_space<vmem>>, vector<32x32xf32>,
    } else {
    }
    return
  }
  func.func @transform_0(%arg0: i32, %arg1: i32) -> (i32, i32) {
    %c0_i32 = arith.constant 0 : i32
    %c0_i32_0 = arith.constant 0 : i32
    return %arg0, %c0_i32 : i32, i32
  }
  func.func @transform_1(%arg0: i32, %arg1: i32) -> (i32, i32) {
    %c0_i32 = arith.constant 0 : i32
    %c0_i32_0 = arith.constant 0 : i32
    return %arg1, %c0_i32 : i32, i32
  }
  func.func @transform_2(%arg0: i32, %arg1: i32) -> (i32, i32) {
    %c0_i32 = arith.constant 0 : i32
    %c0_i32_0 = arith.constant 0 : i32
    return %arg0, %c0_i32 : i32, i32
  }
}

</mosaic_0001>

<llo_original>
// kernel: tpu_custom_call.1
$region0: #{tpu_custom_call.1}
  #allocation0 [shape = 'u32[]', space=smem, size = 0x4, offset = 0x4, fixed_abs, tag = 'smem constant byte address 0x4 - core index']
  #allocation1 [shape = 'u32[144,128]{1,0:T(1,128)}', space=vmem, size = 0x12000, scoped, tag = 'internal scratch']
  #allocation2 [shape = 'f32[32,32]{1,0:T(8,128)}', space=vmem, size = 0x4000, scoped, tag = 'scratch operand']
  %s0 = inlined_call_operand.vmem [shape: s32[32,1], index: 0, kind: input, shape index: {}]
  %s1 = inlined_call_operand.vmem [shape: f32[64,32], index: 1, kind: input, shape index: {}]
  %s2 = inlined_call_operand.hbm [shape: f32[32,32], index: 2, kind: output, shape index: {}]
  %s3 = sld [smem:[#allocation0]]
  $region26: #{tpu_custom_call.1} parent=0
    _
  %s5 = ssub.s32 1, %s3
  %s6 = scalar_select 0, %s5, %s3
  $region1: #{tpu_custom_call.1} parent=0
    #allocation3 [shape = 'u8[16384]{0}', space=vmem, size = 0x4000, scoped, tag = 'output window, operand 0, single buffered']
    #allocation4 [shape = 's32[1]{0}', space=sflag, size = 0x4, scoped, tag = 'scoped memory for tpu_custom_call.1']
    %7 = vsyncpa [#allocation4], 0
    // Predicated region
    $region2: #{tpu_custom_call.1} parent=1 // pred_check
      _
    $region3: #{tpu_custom_call.1} parent=1 // pred_check_branch
      %9 = sbr.rel (0) target = $region5
    $region4: #{tpu_custom_call.1} parent=1 // pred_region
      _
    $region5: #{tpu_custom_call.1} parent=1 // pred_fallthru
      _
    // Predicated region
    $region6: #{tpu_custom_call.1} parent=1 // pred_check
      _
    $region7: #{tpu_custom_call.1} parent=1 // pred_check_branch
      %11 = sbr.rel (0) target = $region9
    $region8: #{tpu_custom_call.1} parent=1 // pred_region
      _
    $region9: #{tpu_custom_call.1} parent=1 // pred_fallthru
      _
    %p12 = scmp.eq.s32.totalorder 0, 0
    // Predicated region
    $region10: #{tpu_custom_call.1} parent=1 // pred_check
      %p13 = pneg %p12
    $region11: #{tpu_custom_call.1} parent=1 // pred_check_branch
      %15 = sbr.rel (%p13) target = $region13
    $region12: #{tpu_custom_call.1} parent=1 // pred_region
      %vm16 = vcmask 261120
      %17 = vst.msk [vmem:[#allocation2] sm:$0xff] %vm16, 0.0
      %18 = vst.msk [vmem:[#allocation2 + $0x8] sm:$0xff] %vm16, 0.0
      %19 = vst.msk [vmem:[#allocation2 + $0x10] sm:$0xff] %vm16, 0.0
      %20 = vst.msk [vmem:[#allocation2 + $0x18] sm:$0xff] %vm16, 0.0
    $region13: #{tpu_custom_call.1} parent=1 // pred_fallthru
      _
    %v21 = vld [vmem:[%s0] sm:$0xff]
    %v22 = vld [vmem:[%s0 + $0x8] sm:$0xff]
    %v23 = vld [vmem:[%s0 + $0x10] sm:$0xff]
    %v24 = vld [vmem:[%s0 + $0x18] sm:$0xff]
    %s25 = smul.u32 0, 64
    %v26 = vlaneseq
    %v27 = vand.u32 %v26, 127
    %v28 = vstv %s25
    %v29 = vadd.s32 %v27, %v28
    %30 = vset.pattern.permute.xlu0 0
    %31 = vperm.xlu0 %30, %v21
    %v32 = vpop.permute.xlu0 %31
    %33 = vset.pattern.permute.xlu0 0
    %34 = vperm.xlu0 %33, %v22
    %v35 = vpop.permute.xlu0 %34
    %36 = vset.pattern.permute.xlu0 0
    %37 = vperm.xlu0 %36, %v23
    %v38 = vpop.permute.xlu0 %37
    %39 = vset.pattern.permute.xlu0 0
    %40 = vperm.xlu0 %39, %v24
    %v41 = vpop.permute.xlu0 %40
    %vm42 = vcmp.eq.s32.totalorder %v32, %v29
    %vm43 = vcmp.eq.s32.totalorder %v35, %v29
    %vm44 = vcmp.eq.s32.totalorder %v38, %v29
    %vm45 = vcmp.eq.s32.totalorder %v41, %v29
    %v46 = vsel %vm42, 1, 0
    %v47 = vsel %vm43, 1, 0
    %v48 = vsel %vm44, 1, 0
    %v49 = vsel %vm45, 1, 0
    %v50 = vcvt.s32.f32 %v46
    %v51 = vcvt.s32.f32 %v47
    %v52 = vcvt.s32.f32 %v48
    %v53 = vcvt.s32.f32 %v49
    %v54 = vld [vmem:[#allocation2] sm:$0xff]
    %v55 = vld [vmem:[#allocation2 + $0x8] sm:$0xff]
    %v56 = vld [vmem:[#allocation2 + $0x10] sm:$0xff]
    %v57 = vld [vmem:[#allocation2 + $0x18] sm:$0xff]
    %v58 = vld [vmem:[%s1] sm:$0xff]
    %v59 = vld [vmem:[%s1 + $0x8] sm:$0xff]
    %v60 = vld [vmem:[%s1 + $0x10] sm:$0xff]
    %v61 = vld [vmem:[%s1 + $0x18] sm:$0xff]
    %v62 = vld [vmem:[%s1 + $0x20] sm:$0xff]
    %v63 = vld [vmem:[%s1 + $0x28] sm:$0xff]
    %v64 = vld [vmem:[%s1 + $0x30] sm:$0xff]
    %v65 = vld [vmem:[%s1 + $0x38] sm:$0xff]
    %vm66 = vcmask 523264
    %v68 = vsel %vm66, %v50, 0
    %v71 = vsel %vm66, %v51, 0
    %v74 = vsel %vm66, %v52, 0
    %v77 = vsel %vm66, %v53, 0
    %79 = vmatprep.subr.mxu0 0.0
    %80 = vmatpush1.msra.mxu0 %v58
    %81 = vmatprep.subr.mxu0 0.0
    %82 = vmatpush1.msra.mxu0 %v59
    %83 = vmatprep.subr.mxu0 0.0
    %84 = vmatpush1.msra.mxu0 %v60
    %85 = vmatprep.subr.mxu0 0.0
    %86 = vmatpush1.msra.mxu0 %v61
    %87 = vmatprep.subr.mxu0 0.0
    %88 = vmatpush1.msra.mxu0 %v62
    %89 = vmatprep.subr.mxu0 0.0
    %90 = vmatpush1.msra.mxu0 %v63
    %91 = vmatprep.subr.mxu0 0.0
    %92 = vmatpush1.msra.mxu0 %v64
    %93 = vmatprep.subr.mxu0 0.0
    %94 = vmatpush1.msra.mxu0 %v65
    %95 = vmatprep.subr.mxu0 0.0
    %96 = vmatpush1.msra.mxu0 0.0
    %97 = vmatprep.subr.mxu0 0.0
    %98 = vmatpush1.msra.mxu0 0.0
    %99 = vmatprep.subr.mxu0 0.0
    %100 = vmatpush1.msra.mxu0 0.0
    %101 = vmatprep.subr.mxu0 0.0
    %102 = vmatpush1.msra.mxu0 0.0
    %103 = vmatprep.subr.mxu0 0.0
    %104 = vmatpush1.msra.mxu0 0.0
    %105 = vmatprep.subr.mxu0 0.0
    %106 = vmatpush1.msra.mxu0 0.0
    %107 = vmatprep.subr.mxu0 0.0
    %108 = vmatpush1.msra.mxu0 0.0
    %109 = vmatprep.subr.mxu0 0.0
    %110 = vmatpush1.msra.mxu0 0.0
    %111 = vmatprep.subr.mxu0 0.0
    %112 = vmatpush1.msra.mxu0 0.0
    %113 = vmatprep.subr.mxu0 0.0
    %114 = vmatpush1.msra.mxu0 0.0
    %115 = vmatprep.subr.mxu0 0.0
    %116 = vmatpush1.msra.mxu0 0.0
    %117 = vmatprep.subr.mxu0 0.0
    %118 = vmatpush1.msra.mxu0 0.0
    %119 = vmatprep.subr.mxu0 0.0
    %120 = vmatpush1.msra.mxu0 0.0
    %121 = vmatprep.subr.mxu0 0.0
    %122 = vmatpush1.msra.mxu0 0.0
    %123 = vmatprep.subr.mxu0 0.0
    %124 = vmatpush1.msra.mxu0 0.0
    %125 = vmatprep.subr.mxu0 0.0
    %126 = vmatpush1.msra.mxu0 0.0
    %127 = vmatprep.subr.mxu0 0.0
    %128 = vmatpush1.msra.mxu0 0.0
    %129 = vmatprep.subr.mxu0 0.0
    %130 = vmatpush1.msra.mxu0 0.0
    %131 = vmatprep.subr.mxu0 0.0
    %132 = vmatpush1.msra.mxu0 0.0
    %133 = vmatprep.subr.mxu0 0.0
    %134 = vmatpush1.msra.mxu0 0.0
    %135 = vmatprep.subr.mxu0 0.0
    %136 = vmatpush1.msra.mxu0 0.0
    %137 = vmatprep.subr.mxu0 0.0
    %138 = vmatpush1.msra.mxu0 0.0
    %139 = vmatprep.subr.mxu0 0.0
    %140 = vmatpush1.msra.mxu0 0.0
    %141 = vmatprep.subr.mxu0 0.0
    %142 = vmatpush1.msra.mxu0 0.0
    %143 = vmatprep.mubr.f32.mxu0 0.0
    %144 = vmatmul.mubr.f32.gmra.mrb[0].mxu0 %v68
    %v145 = vpop.f32.mrb[0].mxu0
    %v146 = vadd.f32 0.0, %v145
    %v147 = vpop.f32.mrb[0].mxu0
    %148 = vmatprep.mubr.f32.mxu0 0.0
    %149 = vmatmul.mubr.f32.gmra.mrb[0].mxu0 %v71
    %v150 = vpop.f32.mrb[0].mxu0
    %v151 = vadd.f32 0.0, %v150
    %v152 = vpop.f32.mrb[0].mxu0
    %153 = vmatprep.mubr.f32.mxu0 0.0
    %154 = vmatmul.mubr.f32.gmra.mrb[0].mxu0 %v74
    %v155 = vpop.f32.mrb[0].mxu0
    %v156 = vadd.f32 0.0, %v155
    %v157 = vpop.f32.mrb[0].mxu0
    %158 = vmatprep.mubr.f32.mxu0 0.0
    %159 = vmatmul.mubr.f32.gmra.mrb[0].mxu0 %v77
    %v160 = vpop.f32.mrb[0].mxu0
    %v161 = vadd.f32 0.0, %v160
    %v162 = vpop.f32.mrb[0].mxu0
    %163 = vdwg.mxu0
    %v164 = vadd.f32 %v54, %v146
    %v165 = vadd.f32 %v55, %v151
    %v166 = vadd.f32 %v56, %v156
    %v167 = vadd.f32 %v57, %v161
    %vm168 = vcmask 261120
    %169 = vst.msk [vmem:[#allocation2] sm:$0xff] %vm168, %v164
    %170 = vst.msk [vmem:[#allocation2 + $0x8] sm:$0xff] %vm168, %v165
    %171 = vst.msk [vmem:[#allocation2 + $0x10] sm:$0xff] %vm168, %v166
    %172 = vst.msk [vmem:[#allocation2 + $0x18] sm:$0xff] %vm168, %v167
    // Predicated region
    $region14: #{tpu_custom_call.1} parent=1 // pred_check
      %p173 = pneg %p12
    $region15: #{tpu_custom_call.1} parent=1 // pred_check_branch
      %175 = sbr.rel (%p173) target = $region17
    $region16: #{tpu_custom_call.1} parent=1 // pred_region
      %v176 = vld [vmem:[#allocation2] sm:$0xff]
      %v177 = vld [vmem:[#allocation2 + $0x8] sm:$0xff]
      %v178 = vld [vmem:[#allocation2 + $0x10] sm:$0xff]
      %v179 = vld [vmem:[#allocation2 + $0x18] sm:$0xff]
      %180 = vst.msk [vmem:[#allocation3] sm:$0xff] %vm168, %v176
      %181 = vst.msk [vmem:[#allocation3 + $0x8] sm:$0xff] %vm168, %v177
      %182 = vst.msk [vmem:[#allocation3 + $0x10] sm:$0xff] %vm168, %v178
      %183 = vst.msk [vmem:[#allocation3 + $0x18] sm:$0xff] %vm168, %v179
    $region17: #{tpu_custom_call.1} parent=1 // pred_fallthru
      _
    // Predicated region
    $region18: #{tpu_custom_call.1} parent=1 // pred_check
      _
    $region19: #{tpu_custom_call.1} parent=1 // pred_check_branch
      %185 = sbr.rel (0) target = $region21
    $region20: #{tpu_custom_call.1} parent=1 // pred_region
      %s187 = ssub.s32 512, 512
      %188 = vsyncadd [#allocation4], %s187
      %s189 = sshll.u32 [#allocation3], 4
      %s190 = int_to_ptr.vmem [resolvable:$true] %s189
      %195 = dma.vmem_to_hbm [thread:$0]  %s190, 512, %s2, [#allocation4], 128, 128, 8
    $region21: #{tpu_custom_call.1} parent=1 // pred_fallthru
      _
    // Predicated region
    $region22: #{tpu_custom_call.1} parent=1 // pred_check
      _
    $region23: #{tpu_custom_call.1} parent=1 // pred_check_branch
      %197 = sbr.rel (0) target = $region25
    $region24: #{tpu_custom_call.1} parent=1 // pred_region
      %198 = dma.done [#allocation4], 512
    $region25: #{tpu_custom_call.1} parent=1 // pred_fallthru
      _
    %199 = vsyncpa [#allocation4], 1

</llo_original>
